<compile_context>
chip_gen: v6e
topology: v6e:2x2x1
jax: 0.10.0
libtpu: 0.0.40
codegen_flags: <defaults>
</compile_context>

<pallas_src>
import functools
import math

import jax
import jax.numpy as jnp
from jax import lax
from jax.experimental import pallas as pl
from jax.experimental.pallas import tpu as pltpu


def _round_up(x, m):
    return ((x + m - 1) // m) * m


def _device_kind():
    try:
        return jax.devices()[0].device_kind.lower()
    except Exception:
        return ""


def _is_v5e():
    kind = _device_kind()
    return ("v5 lite" in kind) or ("v5e" in kind) or ("v5litepod" in kind)


def _vmem_capacity_bytes():
    try:
        return int(pltpu.get_tpu_info().vmem_capacity_bytes)
    except Exception:
        return 64 * 1024 * 1024  # conservative fallback (v7x per-TensorCore)


def _adapter_kernel(scale_ref, x_ref, wd_ref, bd_ref, wu_ref, bu_ref, *rest,
                    residual_mode, mxu_dtype):
    """Fused down-proj -> ReLU -> up-proj -> scale (-> +residual)."""
    if residual_mode == "separate":
        res_ref, o_ref = rest
    else:
        (o_ref,) = rest

    f32 = jnp.float32
    x = x_ref[...]                                              # [tm, D]

    if mxu_dtype is not None:
        lhs0 = x.astype(mxu_dtype)
        rhs0 = wd_ref[...].astype(mxu_dtype)
    else:
        cd = jnp.promote_types(x_ref.dtype, wd_ref.dtype)
        lhs0 = x.astype(cd)
        rhs0 = wd_ref[...].astype(cd)

    # down = x @ W_down^T   (W_down kept in torch layout [bottleneck, D]).
    down = lax.dot_general(
        lhs0, rhs0,
        dimension_numbers=(((1,), (1,)), ((), ())),
        preferred_element_type=f32)                             # [tm, B]
    down = jnp.maximum(down + bd_ref[...].astype(f32), 0.0)     # bias + ReLU

    # up = down @ W_up^T    (W_up kept in torch layout [D, bottleneck]).
    up_dtype = mxu_dtype if mxu_dtype is not None else wu_ref.dtype
    wu = wu_ref[...]
    if mxu_dtype is not None:
        wu = wu.astype(mxu_dtype)
    up = lax.dot_general(
        down.astype(up_dtype), wu,
        dimension_numbers=(((1,), (1,)), ((), ())),
        preferred_element_type=f32)                             # [tm, D]
    up = (up + bu_ref[...].astype(f32)) * scale_ref[0]

    if residual_mode == "none":
        o_ref[...] = up.astype(o_ref.dtype)
    else:
        res = x if residual_mode == "x" else res_ref[...]
        if res.dtype == f32:
            o_ref[...] = (up + res).astype(o_ref.dtype)
        else:
            # Add in the I/O dtype after downcasting `up`: avoids an extra
            # full-tile f32 copy of the residual (VMEM + VPU cast pass).
            o_ref[...] = (up.astype(o_ref.dtype) + res).astype(o_ref.dtype)


def _select_tile(n_tok, d, bneck, x_bytes, out_bytes, res_bytes, w_bytes):
    """Pick the token tile (multiple of 8) and an explicit vmem_limit_bytes
    from the real per-step footprint."""
    cap = _vmem_capacity_bytes()
    if _is_v5e():
        tm_target, budget = 512, 28 * 1024 * 1024
    elif cap <= 64 * 1024 * 1024:          # v7x-class: 64 MiB per TensorCore
        tm_target, budget = 1024, 40 * 1024 * 1024
    else:                                  # v5e/v6e-class: 128 MiB physical
        tm_target, budget = 1024, 64 * 1024 * 1024

    def footprint(tm):
        streams = 2 * tm * d * (x_bytes + out_bytes + res_bytes)   # dbl-buffered
        weights = 2 * w_bytes * (2 * bneck * d + bneck + d)        # dbl-buffered
        temps = 4 * tm * (d + bneck)       # f32 `up` + `down`
        temps += 2 * tm * (d + bneck)      # bf16 cast copies / fusion slack
        return streams + weights + temps

    n8 = _round_up(max(n_tok, 1), 8)
    # Keep >= 2 grid blocks whenever possible so the "parallel" grid can be
    # sharded across both TensorCores on dual-core chips (v7x).  On single-TC
    # chips the extra block costs one ~0.35us pipeline step (negligible).
    two_block_cap = _round_up(max(pl.cdiv(n8, 2), 8), 8)
    tm = min(tm_target, n8, two_block_cap)
    tm = _round_up(tm, 8)
    while tm > 8 and footprint(tm) > budget:
        tm -= 8
    fp = footprint(tm)
    vmem_limit = int(min(0.9 * cap, max(32 * 1024 * 1024, 1.5 * fp + (4 << 20))))
    return tm, vmem_limit


def adapter_forward(x, w_down, b_down, w_up, b_up, scale=1.0,
                    add_residual=False, residual=None, mxu_bf16=None):
    """x: [..., d_model].  w_down: [bottleneck, d_model] (torch layout),
    w_up: [d_model, bottleneck] (torch layout).  scale may be a Python number
    or a (learnable) scalar array.  Returns same shape/dtype as x.
    mxu_bf16: None=auto (bf16 matmul operands on v5e only), True/False force."""
    orig_shape = x.shape
    d_model = orig_shape[-1]
    bottleneck = w_down.shape[0]

    x2 = x.reshape(-1, d_model)
    n_tok = x2.shape[0]
    if n_tok == 0:
        return jnp.zeros(orig_shape, dtype=x.dtype)

    # Residual handling: avoid a second DMA of the same HBM data.
    if add_residual and residual is not None and residual is not x:
        residual_mode = "separate"
        res2 = residual.reshape(-1, d_model)
    elif add_residual:
        residual_mode = "x"      # residual == x: reuse the x tile in VMEM
        res2 = None
    else:
        residual_mode = "none"
        res2 = None

    if mxu_bf16 is None:
        # v5e has no fast f32 MXU path; run matmuls in bf16 (f32 accumulate)
        # there so they stay hidden under the DMAs.
        mxu_bf16 = (_is_v5e()
                    and x.dtype == jnp.float32
                    and w_down.dtype == jnp.float32
                    and w_up.dtype == jnp.float32)
    mxu_dtype = jnp.bfloat16 if mxu_bf16 else None

    itemsize = jnp.dtype(x.dtype).itemsize
    res_bytes = jnp.dtype(res2.dtype).itemsize if residual_mode == "separate" else 0
    w_bytes = max(jnp.dtype(w_down.dtype).itemsize, jnp.dtype(w_up.dtype).itemsize)
    tm, vmem_limit = _select_tile(n_tok, d_model, bottleneck,
                                  itemsize, itemsize, res_bytes, w_bytes)

    bd = b_down.reshape(1, bottleneck)
    bu = b_up.reshape(1, d_model)
    scale_arr = jnp.asarray(scale, dtype=jnp.float32).reshape(1)

    grid = (pl.cdiv(n_tok, tm),)   # ragged last block handled by Pallas

    in_specs = [
        pl.BlockSpec(memory_space=pltpu.MemorySpace.SMEM),       # scale (1,)
        pl.BlockSpec((tm, d_model), lambda i: (i, 0)),           # x tile
        pl.BlockSpec((bottleneck, d_model), lambda i: (0, 0)),   # W_down (torch)
        pl.BlockSpec((1, bottleneck), lambda i: (0, 0)),         # b_down
        pl.BlockSpec((d_model, bottleneck), lambda i: (0, 0)),   # W_up (torch)
        pl.BlockSpec((1, d_model), lambda i: (0, 0)),            # b_up
    ]
    args = [scale_arr, x2, w_down, bd, w_up, bu]
    if residual_mode == "separate":
        in_specs.append(pl.BlockSpec((tm, d_model), lambda i: (i, 0)))
        args.append(res2)

    kernel = functools.partial(_adapter_kernel,
                               residual_mode=residual_mode,
                               mxu_dtype=mxu_dtype)

    out = pl.pallas_call(
        kernel,
        out_shape=jax.ShapeDtypeStruct((n_tok, d_model), x.dtype),
        grid_spec=pltpu.PrefetchScalarGridSpec(
            num_scalar_prefetch=0,
            grid=grid,
            in_specs=in_specs,
            out_specs=pl.BlockSpec((tm, d_model), lambda i: (i, 0)),
        ),
        compiler_params=pltpu.CompilerParams(
            dimension_semantics=("parallel",),
            vmem_limit_bytes=vmem_limit),
    )(*args)

    return out.reshape(orig_shape)


def init_adapter_params(key, d_model, bottleneck, dtype=jnp.float32):
    """Match the module's __init__: down_proj.weight ~ kaiming_uniform(a=sqrt(5)),
    down_proj.bias = 0, up_proj.weight = 0, up_proj.bias = 0."""
    bound = 1.0 / math.sqrt(d_model)   # kaiming_uniform(a=sqrt(5)) -> 1/sqrt(fan_in)
    w_down = jax.random.uniform(key, (bottleneck, d_model),
                                minval=-bound, maxval=bound, dtype=dtype)
    b_down = jnp.zeros((bottleneck,), dtype=dtype)
    w_up = jnp.zeros((d_model, bottleneck), dtype=dtype)
    b_up = jnp.zeros((d_model,), dtype=dtype)
    return w_down, b_down, w_up, b_up


def adapter_reference(x, w_down, b_down, w_up, b_up, scale,
                      add_residual=False, residual=None):
    residual = x if residual is None else residual
    down = jnp.maximum(x @ w_down.T + b_down, 0.0)
    up = (down @ w_up.T + b_up) * scale
    return up + residual if add_residual else up


if __name__ == "__main__":
    key = jax.random.PRNGKey(0)
    k_x, k_w, k_wu, k_r = jax.random.split(key, 4)

    # Numerics of the default (auto) path: exact-ish f32 everywhere except on
    # v5e, where the MXU operands are auto-cast to bf16 (f32 accumulation).
    if _is_v5e():
        tol = dict(atol=3e-2, rtol=3e-2)
    else:
        tol = dict(atol=1e-5, rtol=1e-5)

    # Small shapes consistent with the module.
    batch, seq, d_model, bottleneck = 2, 8, 32, 16
    x = jax.random.normal(k_x, (batch, seq, d_model), dtype=jnp.float32)
    w_down, b_down, w_up, b_up = init_adapter_params(k_w, d_model, bottleneck)

    # 1) Default init (up_proj weight zero) -> output zero, no residual stream.
    out = adapter_forward(x, w_down, b_down, w_up, b_up, 1.0, add_residual=False)
    jax.block_until_ready(out)
    ref = adapter_reference(x, w_down, b_down, w_up, b_up, 1.0)
    assert out.shape == x.shape and out.dtype == x.dtype
    assert jnp.allclose(out, ref, **tol)

    # 2) Nonzero up-proj + residual==x path (x tile reused in VMEM),
    #    scale given as an array (no Python float() bake).
    bound = 1.0 / math.sqrt(bottleneck)
    w_up_nz = jax.random.uniform(k_wu, (d_model, bottleneck),
                                 minval=-bound, maxval=bound, dtype=jnp.float32)
    scale_arr = jnp.asarray(0.5, dtype=jnp.float32)
    out2 = adapter_forward(x, w_down, b_down, w_up_nz, b_up, scale_arr,
                           add_residual=True)
    jax.block_until_ready(out2)
    ref2 = adapter_reference(x, w_down, b_down, w_up_nz, b_up, 0.5,
                             add_residual=True)
    assert jnp.allclose(out2, ref2, **tol)

    # 3) Explicit (different) residual tensor -> separate residual stream.
    res = jax.random.normal(k_r, (batch, seq, d_model), dtype=jnp.float32)
    out3 = adapter_forward(x, w_down, b_down, w_up_nz, b_up, 2.0,
                           add_residual=True, residual=res)
    jax.block_until_ready(out3)
    ref3 = adapter_reference(x, w_down, b_down, w_up_nz, b_up, 2.0,
                             add_residual=True, residual=res)
    assert jnp.allclose(out3, ref3, **tol)

    # 4) Larger multi-tile case with a token count that is NOT tile-aligned:
    #    exercises the padless ragged last block, big-tile selection and the
    #    multi-block "parallel" grid (no jnp.pad / output slice anywhere).
    B2, S2, D2, BT2 = 3, 403, 256, 64          # n_tok = 1209 (ragged)
    x_big = jax.random.normal(k_x, (B2, S2, D2), dtype=jnp.float32)
    wd2, bd2, _, bu2 = init_adapter_params(k_w, D2, BT2)
    wu2 = jax.random.uniform(k_wu, (D2, BT2), minval=-0.05, maxval=0.05,
                             dtype=jnp.float32)
    out4 = adapter_forward(x_big, wd2, bd2, wu2, bu2, 1.0, add_residual=True)
    jax.block_until_ready(out4)
    ref4 = adapter_reference(x_big, wd2, bd2, wu2, bu2, 1.0, add_residual=True)
    tol4 = tol if _is_v5e() else dict(atol=1e-4, rtol=1e-4)
    assert jnp.allclose(out4, ref4, **tol4)

    # 5) Explicit bf16-MXU path (what 'auto' picks on v5e), loose tolerance.
    out5 = adapter_forward(x, w_down, b_down, w_up_nz, b_up, 0.5,
                           add_residual=True, mxu_bf16=True)
    jax.block_until_ready(out5)
    assert jnp.allclose(out5, ref2, atol=3e-2, rtol=3e-2)

    # 6) bf16 I/O path (halves HBM traffic; residual added in bf16 after the
    #    f32 compute is downcast -> no extra f32 residual temp).
    x_bf = x.astype(jnp.bfloat16)
    out6 = adapter_forward(x_bf, w_down.astype(jnp.bfloat16),
                           b_down.astype(jnp.bfloat16),
                           w_up_nz.astype(jnp.bfloat16),
                           b_up.astype(jnp.bfloat16), 0.5, add_residual=True)
    jax.block_until_ready(out6)
    assert out6.dtype == jnp.bfloat16
    assert jnp.allclose(out6.astype(jnp.float32), ref2, atol=5e-2, rtol=5e-2)

    print("KERNEL_OK")
</pallas_src>

<mosaic_0001>
module attributes {stable_mosaic.version = 11 : i64} {
  func.func @_adapter_kernel(%arg0: i32, %arg1: memref<1xf32, #tpu.memory_space<smem>>, %arg2: memref<8x32xf32, #tpu.memory_space<vmem>>, %arg3: memref<16x32xf32, #tpu.memory_space<vmem>>, %arg4: memref<1x16xf32, #tpu.memory_space<vmem>>, %arg5: memref<32x16xf32, #tpu.memory_space<vmem>>, %arg6: memref<1x32xf32, #tpu.memory_space<vmem>>, %arg7: memref<8x32xf32, #tpu.memory_space<vmem>>) attributes {dimension_semantics = [#tpu.dimension_semantics<parallel>], iteration_bounds = array<i64: 2>, scalar_prefetch = 0 : i64, scratch_operands = 0 : i64, tpu.core_type = #tpu.core_type<tc>, window_params = [{transform_indices = @transform_0, window_bounds = array<i64: 1>}, {transform_indices = @transform_1, window_bounds = array<i64: 8, 32>}, {pipeline_mode = #tpu.pipeline_mode<synchronous>, transform_indices = @transform_2, window_bounds = array<i64: 16, 32>}, {pipeline_mode = #tpu.pipeline_mode<synchronous>, transform_indices = @transform_3, window_bounds = array<i64: 1, 16>}, {pipeline_mode = #tpu.pipeline_mode<synchronous>, transform_indices = @transform_4, window_bounds = array<i64: 32, 16>}, {pipeline_mode = #tpu.pipeline_mode<synchronous>, transform_indices = @transform_5, window_bounds = array<i64: 1, 32>}, {transform_indices = @transform_6, window_bounds = array<i64: 8, 32>}]} {
    %c0 = arith.constant 0 : index
    %c0_0 = arith.constant 0 : index
    %0 = vector.load %arg2[%c0, %c0_0] : memref<8x32xf32, #tpu.memory_space<vmem>>, vector<8x32xf32>
    %c0_1 = arith.constant 0 : index
    %c0_2 = arith.constant 0 : index
    %1 = vector.load %arg3[%c0_1, %c0_2] : memref<16x32xf32, #tpu.memory_space<vmem>>, vector<16x32xf32>
    %cst = arith.constant dense<0.000000e+00> : vector<8x16xf32>
    %2 = tpu.matmul %0, %1, %cst {dimension_numbers = #tpu.dot_dimension_numbers<[1], [1], [0], [0], [0, 0, 1, 0], [], []>} : vector<8x32xf32>, vector<16x32xf32>, vector<8x16xf32> -> vector<8x16xf32>
    %c0_3 = arith.constant 0 : index
    %c0_4 = arith.constant 0 : index
    %3 = vector.load %arg4[%c0_3, %c0_4] : memref<1x16xf32, #tpu.memory_space<vmem>>, vector<1x16xf32>
    %4 = vector.broadcast %3 : vector<1x16xf32> to vector<8x16xf32>
    %5 = arith.addf %2, %4 : vector<8x16xf32>
    %cst_5 = arith.constant 0.000000e+00 : f32
    %6 = vector.broadcast %cst_5 : f32 to vector<8x16xf32>
    %7 = arith.maximumf %5, %6 : vector<8x16xf32>
    %c0_6 = arith.constant 0 : index
    %c0_7 = arith.constant 0 : index
    %8 = vector.load %arg5[%c0_6, %c0_7] : memref<32x16xf32, #tpu.memory_space<vmem>>, vector<32x16xf32>
    %cst_8 = arith.constant dense<0.000000e+00> : vector<8x32xf32>
    %9 = tpu.matmul %7, %8, %cst_8 {dimension_numbers = #tpu.dot_dimension_numbers<[1], [1], [0], [0], [0, 0, 1, 0], [], []>} : vector<8x16xf32>, vector<32x16xf32>, vector<8x32xf32> -> vector<8x32xf32>
    %c0_9 = arith.constant 0 : index
    %c0_10 = arith.constant 0 : index
    %10 = vector.load %arg6[%c0_9, %c0_10] : memref<1x32xf32, #tpu.memory_space<vmem>>, vector<1x32xf32>
    %11 = vector.broadcast %10 : vector<1x32xf32> to vector<8x32xf32>
    %12 = arith.addf %9, %11 : vector<8x32xf32>
    %c0_11 = arith.constant 0 : index
    %13 = memref.load %arg1[%c0_11] : memref<1xf32, #tpu.memory_space<smem>>
    %14 = vector.broadcast %13 : f32 to vector<8x32xf32>
    %15 = arith.mulf %12, %14 : vector<8x32xf32>
    %c0_12 = arith.constant 0 : index
    %c0_13 = arith.constant 0 : index
    %16 = vector.load %arg7[%c0_12, %c0_13] : memref<8x32xf32, #tpu.memory_space<vmem>>, vector<8x32xf32>
    tpu.vector_store %arg7[%c0_12, %c0_13], %15 {strides = array<i32>} : memref<8x32xf32, #tpu.memory_space<vmem>>, vector<8x32xf32>,
    return
  }
  func.func @transform_0(%arg0: i32) -> i32 {
    %c0_i32 = arith.constant 0 : i32
    %c0_i32_0 = arith.constant 0 : i32
    return %c0_i32 : i32
  }
  func.func @transform_1(%arg0: i32) -> (i32, i32) {
    %c0_i32 = arith.constant 0 : i32
    %c0_i32_0 = arith.constant 0 : i32
    return %arg0, %c0_i32 : i32, i32
  }
  func.func @transform_2(%arg0: i32) -> (i32, i32) {
    %c0_i32 = arith.constant 0 : i32
    %c0_i32_0 = arith.constant 0 : i32
    %c0_i32_1 = arith.constant 0 : i32
    return %c0_i32, %c0_i32_0 : i32, i32
  }
  func.func @transform_3(%arg0: i32) -> (i32, i32) {
    %c0_i32 = arith.constant 0 : i32
    %c0_i32_0 = arith.constant 0 : i32
    %c0_i32_1 = arith.constant 0 : i32
    return %c0_i32, %c0_i32_0 : i32, i32
  }
  func.func @transform_4(%arg0: i32) -> (i32, i32) {
    %c0_i32 = arith.constant 0 : i32
    %c0_i32_0 = arith.constant 0 : i32
    %c0_i32_1 = arith.constant 0 : i32
    return %c0_i32, %c0_i32_0 : i32, i32
  }
  func.func @transform_5(%arg0: i32) -> (i32, i32) {
    %c0_i32 = arith.constant 0 : i32
    %c0_i32_0 = arith.constant 0 : i32
    %c0_i32_1 = arith.constant 0 : i32
    return %c0_i32, %c0_i32_0 : i32, i32
  }
  func.func @transform_6(%arg0: i32) -> (i32, i32) {
    %c0_i32 = arith.constant 0 : i32
    %c0_i32_0 = arith.constant 0 : i32
    return %arg0, %c0_i32 : i32, i32
  }
}

</mosaic_0001>

<llo_original>
// kernel: tpu_custom_call.1
$region0: #{tpu_custom_call.1}
  #allocation0 [shape = 'u32[]', space=smem, size = 0x4, offset = 0x4, fixed_abs, tag = 'smem constant byte address 0x4 - core index']
  #allocation1 [shape = 'u32[144,128]{1,0:T(1,128)}', space=vmem, size = 0x12000, scoped, tag = 'internal scratch']
  #allocation2 [shape = 'f32[1]{0:T(128)S(6)}', space=smem, size = 0x200, scoped, tag = 'scoped memory for tpu_custom_call.1']
  %s0 = inlined_call_operand.<no memory space> [shape: f32[1], index: 0, kind: input, shape index: {}]
  %s1 = inlined_call_operand.vmem [shape: f32[16,32], index: 1, kind: input, shape index: {}]
  %s2 = inlined_call_operand.vmem [shape: f32[16,32], index: 2, kind: input, shape index: {}]
  %s3 = inlined_call_operand.vmem [shape: f32[1,16], index: 3, kind: input, shape index: {}]
  %s4 = inlined_call_operand.vmem [shape: f32[32,16], index: 4, kind: input, shape index: {}]
  %s5 = inlined_call_operand.vmem [shape: f32[1,32], index: 5, kind: input, shape index: {}]
  %s6 = inlined_call_operand.hbm [shape: f32[16,32], index: 6, kind: output, shape index: {}]
  %s7 = sld [smem:[#allocation0]]
  $region57: #{tpu_custom_call.1} parent=0
    _
  %s9 = ssub.s32 1, %s7
  %s10 = scalar_select 0, %s9, %s7
  %11 = sst [smem:[#allocation2]] %s0
  $region1: #{tpu_custom_call.1} parent=0
    #allocation3 [shape = 'u8[8192]{0}', space=vmem, size = 0x2000, scoped, tag = 'output window, operand 0']
    #allocation4 [shape = 's32[2]{0}', space=sflag, size = 0x8, scoped, tag = 'scoped memory for tpu_custom_call.1']
    %12 = vsyncpa [#allocation4], 0
    %s13 = scalar_lea.sflag [#allocation4], 1
    %14 = vsyncpa %s13, 0
    loop: start=0, step=1, limit=4
    $region2: #{tpu_custom_call.1} parent=1 // loop_pre_header
      _
    $region3: #{tpu_custom_call.1} parent=1 // loop_header
      %s16 = sphi 0, %s20
      %p17 = scmp.ge.s32.totalorder %s16, 4
      %s24 = sphi 0, %s24
      %s26 = sphi 0, %s24
      %s27 = sphi 0, %s26
      %s41 = sphi 0, %s27
      %s47 = sphi 0, %s49
      %s50 = sphi 0, %s47
      %s51 = sphi 0, %s50
      %s67 = sphi 0, %s51
      %s71 = sphi 0, %s71
      %s73 = sphi 0, %s71
      %s74 = sphi 0, %s73
      %s88 = sphi 0, %s74
      %s92 = sphi 0, %s92
      %s94 = sphi 0, %s92
      %s95 = sphi 0, %s94
      %s109 = sphi 0, %s95
      %s113 = sphi 0, %s113
      %s115 = sphi 0, %s113
      %s116 = sphi 0, %s115
      %s130 = sphi 0, %s116
      %s134 = sphi 0, %s134
      %s136 = sphi 0, %s134
      %s137 = sphi 0, %s136
      %s151 = sphi 0, %s137
      %s157 = sphi 0, %s159
      %s160 = sphi 0, %s157
      %s161 = sphi 0, %s160
      %s177 = sphi 0, %s161
    $region4: #{tpu_custom_call.1} parent=1 // loop_header_branch
      %19 = sbr.rel (%p17) target = $region8
    $region5: #{tpu_custom_call.1} parent=1 // loop_body
      %s21 = ssub.s32 %s16, 1
      %s22 = ssub.s32 %s16, 2
      %s23 = sadd.s32 %s16, 1
      %s25 = sadd.s32 %s24, 1
      %p28 = scmp.eq.s32.totalorder %s16, 1
      %p29 = scmp.ne.s32.totalorder %s24, %s26
      %p30 = scmp.eq.s32.totalorder %s16, 0
      %p31 = por %p29, %p30
      %p32 = scmp.ne.s32.totalorder %s24, %s26
      %p33 = scmp.eq.s32.totalorder %s21, 1
      %p34 = por %p32, %p33
      %p35 = scmp.ne.s32.totalorder %s26, %s27
      %p36 = scmp.eq.s32.totalorder %s21, 0
      %p37 = por %p35, %p36
      %p38 = scmp.ne.s32.totalorder %s26, %s27
      %p39 = scmp.eq.s32.totalorder %s22, 1
      %p40 = por %p38, %p39
      %p42 = scmp.ne.s32.totalorder %s27, %s41
      %p43 = scmp.eq.s32.totalorder %s22, 0
      %p44 = por %p42, %p43
      %s45 = ssub.s32 %s16, %s23
      %p46 = scmp.eq.s32.totalorder %s45, 0
      %s48 = sadd.s32 %s47, 1
      %s49 = scalar_select %p46, %s47, %s48
      %p52 = pneg %p46
      %p53 = scmp.eq.s32.totalorder %s16, 1
      %p54 = por %p52, %p53
      %p55 = scmp.ne.s32.totalorder %s47, %s50
      %p56 = scmp.eq.s32.totalorder %s16, 0
      %p57 = por %p55, %p56
      %p58 = scmp.ne.s32.totalorder %s47, %s50
      %p59 = scmp.eq.s32.totalorder %s21, 1
      %p60 = por %p58, %p59
      %p61 = scmp.ne.s32.totalorder %s50, %s51
      %p62 = scmp.eq.s32.totalorder %s21, 0
      %p63 = por %p61, %p62
      %p64 = scmp.ne.s32.totalorder %s50, %s51
      %p65 = scmp.eq.s32.totalorder %s22, 1
      %p66 = por %p64, %p65
      %p68 = scmp.ne.s32.totalorder %s51, %s67
      %p69 = scmp.eq.s32.totalorder %s22, 0
      %p70 = por %p68, %p69
      %s72 = sadd.s32 %s71, 1
      %p75 = scmp.eq.s32.totalorder %s16, 1
      %p76 = scmp.ne.s32.totalorder %s71, %s73
      %p77 = scmp.eq.s32.totalorder %s16, 0
      %p78 = por %p76, %p77
      %p79 = scmp.ne.s32.totalorder %s71, %s73
      %p80 = scmp.eq.s32.totalorder %s21, 1
      %p81 = por %p79, %p80
      %p82 = scmp.ne.s32.totalorder %s73, %s74
      %p83 = scmp.eq.s32.totalorder %s21, 0
      %p84 = por %p82, %p83
      %p85 = scmp.ne.s32.totalorder %s73, %s74
      %p86 = scmp.eq.s32.totalorder %s22, 1
      %p87 = por %p85, %p86
      %p89 = scmp.ne.s32.totalorder %s74, %s88
      %p90 = scmp.eq.s32.totalorder %s22, 0
      %p91 = por %p89, %p90
      %s93 = sadd.s32 %s92, 1
      %p96 = scmp.eq.s32.totalorder %s16, 1
      %p97 = scmp.ne.s32.totalorder %s92, %s94
      %p98 = scmp.eq.s32.totalorder %s16, 0
      %p99 = por %p97, %p98
      %p100 = scmp.ne.s32.totalorder %s92, %s94
      %p101 = scmp.eq.s32.totalorder %s21, 1
      %p102 = por %p100, %p101
      %p103 = scmp.ne.s32.totalorder %s94, %s95
      %p104 = scmp.eq.s32.totalorder %s21, 0
      %p105 = por %p103, %p104
      %p106 = scmp.ne.s32.totalorder %s94, %s95
      %p107 = scmp.eq.s32.totalorder %s22, 1
      %p108 = por %p106, %p107
      %p110 = scmp.ne.s32.totalorder %s95, %s109
      %p111 = scmp.eq.s32.totalorder %s22, 0
      %p112 = por %p110, %p111
      %s114 = sadd.s32 %s113, 1
      %p117 = scmp.eq.s32.totalorder %s16, 1
      %p118 = scmp.ne.s32.totalorder %s113, %s115
      %p119 = scmp.eq.s32.totalorder %s16, 0
      %p120 = por %p118, %p119
      %p121 = scmp.ne.s32.totalorder %s113, %s115
      %p122 = scmp.eq.s32.totalorder %s21, 1
      %p123 = por %p121, %p122
      %p124 = scmp.ne.s32.totalorder %s115, %s116
      %p125 = scmp.eq.s32.totalorder %s21, 0
      %p126 = por %p124, %p125
      %p127 = scmp.ne.s32.totalorder %s115, %s116
      %p128 = scmp.eq.s32.totalorder %s22, 1
      %p129 = por %p127, %p128
      %p131 = scmp.ne.s32.totalorder %s116, %s130
      %p132 = scmp.eq.s32.totalorder %s22, 0
      %p133 = por %p131, %p132
      %s135 = sadd.s32 %s134, 1
      %p138 = scmp.eq.s32.totalorder %s16, 1
      %p139 = scmp.ne.s32.totalorder %s134, %s136
      %p140 = scmp.eq.s32.totalorder %s16, 0
      %p141 = por %p139, %p140
      %p142 = scmp.ne.s32.totalorder %s134, %s136
      %p143 = scmp.eq.s32.totalorder %s21, 1
      %p144 = por %p142, %p143
      %p145 = scmp.ne.s32.totalorder %s136, %s137
      %p146 = scmp.eq.s32.totalorder %s21, 0
      %p147 = por %p145, %p146
      %p148 = scmp.ne.s32.totalorder %s136, %s137
      %p149 = scmp.eq.s32.totalorder %s22, 1
      %p150 = por %p148, %p149
      %p152 = scmp.ne.s32.totalorder %s137, %s151
      %p153 = scmp.eq.s32.totalorder %s22, 0
      %p154 = por %p152, %p153
      %s155 = ssub.s32 %s16, %s23
      %p156 = scmp.eq.s32.totalorder %s155, 0
      %s158 = sadd.s32 %s157, 1
      %s159 = scalar_select %p156, %s157, %s158
      %p162 = pneg %p156
      %p163 = scmp.eq.s32.totalorder %s16, 1
      %p164 = por %p162, %p163
      %p165 = scmp.ne.s32.totalorder %s157, %s160
      %p166 = scmp.eq.s32.totalorder %s16, 0
      %p167 = por %p165, %p166
      %p168 = scmp.ne.s32.totalorder %s157, %s160
      %p169 = scmp.eq.s32.totalorder %s21, 1
      %p170 = por %p168, %p169
      %p171 = scmp.ne.s32.totalorder %s160, %s161
      %p172 = scmp.eq.s32.totalorder %s21, 0
      %p173 = por %p171, %p172
      %p174 = scmp.ne.s32.totalorder %s160, %s161
      %p175 = scmp.eq.s32.totalorder %s22, 1
      %p176 = por %p174, %p175
      %p178 = scmp.ne.s32.totalorder %s161, %s177
      %p179 = scmp.eq.s32.totalorder %s22, 0
      %p180 = por %p178, %p179
      %p181 = scmp.le.s32.totalorder 1, %s16
      %p182 = scmp.lt.s32.totalorder %s16, 3
      %p183 = pnand %p181, %p182
      %p184 = pneg %p183
      // Predicated region
      $region9: #{tpu_custom_call.1} parent=5 // pred_check
        _
      $region10: #{tpu_custom_call.1} parent=5 // pred_check_branch
        %186 = sbr.rel (%p183) target = $region12
      $region11: #{tpu_custom_call.1} parent=5 // pred_region
        %s187 = ssub.s32 %s16, 1
        // Predicated region
        $region13: #{tpu_custom_call.1} parent=11 // pred_check
          %p188 = pneg %p37
        $region14: #{tpu_custom_call.1} parent=11 // pred_check_branch
          %190 = sbr.rel (%p188) target = $region16
        $region15: #{tpu_custom_call.1} parent=11 // pred_region
          _
        $region16: #{tpu_custom_call.1} parent=11 // pred_fallthru
          _
        // Predicated region
        $region17: #{tpu_custom_call.1} parent=11 // pred_check
          %p191 = pneg %p84
        $region18: #{tpu_custom_call.1} parent=11 // pred_check_branch
          %193 = sbr.rel (%p191) target = $region20
        $region19: #{tpu_custom_call.1} parent=11 // pred_region
          _
        $region20: #{tpu_custom_call.1} parent=11 // pred_fallthru
          _
        // Predicated region
        $region21: #{tpu_custom_call.1} parent=11 // pred_check
          %p194 = pneg %p105
        $region22: #{tpu_custom_call.1} parent=11 // pred_check_branch
          %196 = sbr.rel (%p194) target = $region24
        $region23: #{tpu_custom_call.1} parent=11 // pred_region
          _
        $region24: #{tpu_custom_call.1} parent=11 // pred_fallthru
          _
        // Predicated region
        $region25: #{tpu_custom_call.1} parent=11 // pred_check
          %p197 = pneg %p126
        $region26: #{tpu_custom_call.1} parent=11 // pred_check_branch
          %199 = sbr.rel (%p197) target = $region28
        $region27: #{tpu_custom_call.1} parent=11 // pred_region
          _
        $region28: #{tpu_custom_call.1} parent=11 // pred_fallthru
          _
        // Predicated region
        $region29: #{tpu_custom_call.1} parent=11 // pred_check
          %p200 = pneg %p147
        $region30: #{tpu_custom_call.1} parent=11 // pred_check_branch
          %202 = sbr.rel (%p200) target = $region32
        $region31: #{tpu_custom_call.1} parent=11 // pred_region
          _
        $region32: #{tpu_custom_call.1} parent=11 // pred_fallthru
          _
      $region12: #{tpu_custom_call.1} parent=5 // pred_fallthru
        _
      %p203 = scmp.lt.s32.totalorder %s16, 2
      // Predicated region
      $region33: #{tpu_custom_call.1} parent=5 // pred_check
        %p204 = pneg %p203
      $region34: #{tpu_custom_call.1} parent=5 // pred_check_branch
        %206 = sbr.rel (%p204) target = $region36
      $region35: #{tpu_custom_call.1} parent=5 // pred_region
        // Predicated region
        $region37: #{tpu_custom_call.1} parent=35 // pred_check
          %p207 = pneg %p57
        $region38: #{tpu_custom_call.1} parent=35 // pred_check_branch
          %209 = sbr.rel (%p207) target = $region40
        $region39: #{tpu_custom_call.1} parent=35 // pred_region
          %p210 = scmp.lt.s32.totalorder %s16, 1
          %s211 = scalar_select %p210, %s16, 1
          %s212 = smul.addr %s211, 8
          %s213 = scalar_lea.vmem %s1, %s212
        $region40: #{tpu_custom_call.1} parent=35 // pred_fallthru
          _
      $region36: #{tpu_custom_call.1} parent=5 // pred_fallthru
        _
      %p214 = scmp.le.s32.totalorder 1, %s16
      %p215 = scmp.lt.s32.totalorder %s16, 3
      %p216 = pnand %p214, %p215
      %p217 = pneg %p216
      // Predicated region
      $region41: #{tpu_custom_call.1} parent=5 // pred_check
        _
      $region42: #{tpu_custom_call.1} parent=5 // pred_check_branch
        %219 = sbr.rel (%p216) target = $region44
      $region43: #{tpu_custom_call.1} parent=5 // pred_region
        %s220 = ssub.s32 %s16, 1
        %p221 = pneg %p37
        %p222 = pneg %p34
        %p223 = scmp.lt.s32.totalorder %s21, 1
        %s224 = scalar_select %p223, %s21, 1
        %s225 = smul.addr %s224, 8
        %s226 = scalar_lea.vmem %s1, %s225
        %p227 = pneg %p63
        %p228 = pneg %p60
        %p229 = pneg %p84
        %p230 = pneg %p81
        %p231 = pneg %p105
        %p232 = pneg %p102
        %p233 = pneg %p126
        %p234 = pneg %p123
        %p235 = pneg %p147
        %p236 = pneg %p144
        %p237 = pneg %p173
        %p238 = pneg %p170
        %s239 = sand.u32 %s160, 1
        %s240 = scalar_lea.sflag [#allocation4], %s239
        %s241 = sand.u32 %s160, 1
        %s242 = smul.addr %s241, 8
        %s243 = scalar_lea.vmem [#allocation3], %s242
        %p244 = scmp.lt.s32.totalorder %s21, 1
        %s245 = scalar_select %p244, %s21, 1
        %s246 = smul.addr %s245, 8
        %s247 = scalar_lea.vmem %s1, %s246
        %v248 = vld [vmem:[%s247] sm:$0xff]
        %v249 = vld [vmem:[%s2] sm:$0xff]
        %v250 = vld [vmem:[%s2 + $0x8] sm:$0xff]
        %v251 = vld [vmem:[%s3] sm:$0x1]
        %v253 = vlaneseq
        %v254 = vshrl.u32 %v253, 7
        %v255 = vsub.s32 0, %v254
        %v256 = vrot.slane %v251, %v255
        %vm258 = vcmask 261120
        %v260 = vsel %vm258, %v248, 0
        %v263 = vsel %vm258, %v249, 0
        %v266 = vsel %vm258, %v250, 0
        %268 = vmatprep.subr.mxu0 0.0
        %269 = vmatpush1.xpose.msra.mxu0 0.0
        %270 = vmatprep.subr.mxu0 0.0
        %271 = vmatpush1.xpose.msra.mxu0 0.0
        %272 = vmatprep.subr.mxu0 0.0
        %273 = vmatpush1.xpose.msra.mxu0 0.0
        %274 = vmatprep.subr.mxu0 0.0
        %275 = vmatpush1.xpose.msra.mxu0 0.0
        %276 = vmatprep.subr.mxu0 0.0
        %277 = vmatpush1.xpose.msra.mxu0 0.0
        %278 = vmatprep.subr.mxu0 0.0
        %279 = vmatpush1.xpose.msra.mxu0 0.0
        %280 = vmatprep.subr.mxu0 0.0
        %281 = vmatpush1.xpose.msra.mxu0 0.0
        %282 = vmatprep.subr.mxu0 0.0
        %283 = vmatpush1.xpose.msra.mxu0 0.0
        %284 = vmatprep.subr.mxu0 0.0
        %285 = vmatpush1.xpose.msra.mxu0 0.0
        %286 = vmatprep.subr.mxu0 0.0
        %287 = vmatpush1.xpose.msra.mxu0 0.0
        %288 = vmatprep.subr.mxu0 0.0
        %289 = vmatpush1.xpose.msra.mxu0 0.0
        %290 = vmatprep.subr.mxu0 0.0
        %291 = vmatpush1.xpose.msra.mxu0 0.0
        %292 = vmatprep.subr.mxu0 0.0
        %293 = vmatpush1.xpose.msra.mxu0 0.0
        %294 = vmatprep.subr.mxu0 0.0
        %295 = vmatpush1.xpose.msra.mxu0 0.0
        %296 = vmatprep.subr.mxu0 0.0
        %297 = vmatpush1.xpose.msra.mxu0 %v266
        %298 = vmatprep.subr.mxu0 0.0
        %299 = vmatpush1.xpose.msra.mxu0 %v263
        %300 = vmatprep.subr.mxu0 0.0
        %301 = vmatpush2.xpose.msra.mxu0 0.0
        %302 = vmatprep.subr.mxu0 0.0
        %303 = vmatpush2.xpose.msra.mxu0 0.0
        %304 = vmatprep.subr.mxu0 0.0
        %305 = vmatpush2.xpose.msra.mxu0 0.0
        %306 = vmatprep.subr.mxu0 0.0
        %307 = vmatpush2.xpose.msra.mxu0 0.0
        %308 = vmatprep.subr.mxu0 0.0
        %309 = vmatpush2.xpose.msra.mxu0 0.0
        %310 = vmatprep.subr.mxu0 0.0
        %311 = vmatpush2.xpose.msra.mxu0 0.0
        %312 = vmatprep.subr.mxu0 0.0
        %313 = vmatpush2.xpose.msra.mxu0 0.0
        %314 = vmatprep.subr.mxu0 0.0
        %315 = vmatpush2.xpose.msra.mxu0 0.0
        %316 = vmatprep.subr.mxu0 0.0
        %317 = vmatpush2.xpose.msra.mxu0 0.0
        %318 = vmatprep.subr.mxu0 0.0
        %319 = vmatpush2.xpose.msra.mxu0 0.0
        %320 = vmatprep.subr.mxu0 0.0
        %321 = vmatpush2.xpose.msra.mxu0 0.0
        %322 = vmatprep.subr.mxu0 0.0
        %323 = vmatpush2.xpose.msra.mxu0 0.0
        %324 = vmatprep.subr.mxu0 0.0
        %325 = vmatpush2.xpose.msra.mxu0 0.0
        %326 = vmatprep.subr.mxu0 0.0
        %327 = vmatpush2.xpose.msra.mxu0 0.0
        %328 = vmatprep.subr.mxu0 0.0
        %329 = vmatpush2.xpose.msra.mxu0 0.0
        %330 = vmatprep.subr.mxu0 0.0
        %331 = vmatpush2.xpose.msra.mxu0 0.0
        %332 = vmatprep.mubr.f32.mxu0 0.0
        %333 = vmatmul.mubr.f32.gmra.mxu0 %v260
        %v334 = vpop.f32.mrf.mxu0
        %v335 = vadd.f32 %v256, %v334
        %v336 = vpop.f32.mrf.mxu0
        %337 = vdwg.mxu0
        %v338 = vmax.f32 %v335, 0.0
        %v339 = vld [vmem:[%s4] sm:$0xff]
        %v340 = vld [vmem:[%s4 + $0x8] sm:$0xff]
        %v341 = vld [vmem:[%s4 + $0x10] sm:$0xff]
        %v342 = vld [vmem:[%s4 + $0x18] sm:$0xff]
        %v343 = vld [vmem:[%s5] sm:$0x1]
        %v345 = vlaneseq
        %v346 = vshrl.u32 %v345, 7
        %v347 = vsub.s32 0, %v346
        %v348 = vrot.slane %v343, %v347
        %vm350 = vcmask 130048
        %v352 = vsel %vm350, %v338, 0
        %v355 = vsel %vm350, %v339, 0
        %v358 = vsel %vm350, %v340, 0
        %v361 = vsel %vm350, %v341, 0
        %v364 = vsel %vm350, %v342, 0
        %366 = vmatprep.subr.mxu0 0.0
        %367 = vmatpush1.xpose.msra.mxu0 0.0
        %368 = vmatprep.subr.mxu0 0.0
        %369 = vmatpush1.xpose.msra.mxu0 0.0
        %370 = vmatprep.subr.mxu0 0.0
        %371 = vmatpush1.xpose.msra.mxu0 0.0
        %372 = vmatprep.subr.mxu0 0.0
        %373 = vmatpush1.xpose.msra.mxu0 0.0
        %374 = vmatprep.subr.mxu0 0.0
        %375 = vmatpush1.xpose.msra.mxu0 0.0
        %376 = vmatprep.subr.mxu0 0.0
        %377 = vmatpush1.xpose.msra.mxu0 0.0
        %378 = vmatprep.subr.mxu0 0.0
        %379 = vmatpush1.xpose.msra.mxu0 0.0
        %380 = vmatprep.subr.mxu0 0.0
        %381 = vmatpush1.xpose.msra.mxu0 0.0
        %382 = vmatprep.subr.mxu0 0.0
        %383 = vmatpush1.xpose.msra.mxu0 0.0
        %384 = vmatprep.subr.mxu0 0.0
        %385 = vmatpush1.xpose.msra.mxu0 0.0
        %386 = vmatprep.subr.mxu0 0.0
        %387 = vmatpush1.xpose.msra.mxu0 0.0
        %388 = vmatprep.subr.mxu0 0.0
        %389 = vmatpush1.xpose.msra.mxu0 0.0
        %390 = vmatprep.subr.mxu0 0.0
        %391 = vmatpush1.xpose.msra.mxu0 %v364
        %392 = vmatprep.subr.mxu0 0.0
        %393 = vmatpush1.xpose.msra.mxu0 %v361
        %394 = vmatprep.subr.mxu0 0.0
        %395 = vmatpush1.xpose.msra.mxu0 %v358
        %396 = vmatprep.subr.mxu0 0.0
        %397 = vmatpush1.xpose.msra.mxu0 %v355
        %398 = vmatprep.subr.mxu0 0.0
        %399 = vmatpush2.xpose.msra.mxu0 0.0
        %400 = vmatprep.subr.mxu0 0.0
        %401 = vmatpush2.xpose.msra.mxu0 0.0
        %402 = vmatprep.subr.mxu0 0.0
        %403 = vmatpush2.xpose.msra.mxu0 0.0
        %404 = vmatprep.subr.mxu0 0.0
        %405 = vmatpush2.xpose.msra.mxu0 0.0
        %406 = vmatprep.subr.mxu0 0.0
        %407 = vmatpush2.xpose.msra.mxu0 0.0
        %408 = vmatprep.subr.mxu0 0.0
        %409 = vmatpush2.xpose.msra.mxu0 0.0
        %410 = vmatprep.subr.mxu0 0.0
        %411 = vmatpush2.xpose.msra.mxu0 0.0
        %412 = vmatprep.subr.mxu0 0.0
        %413 = vmatpush2.xpose.msra.mxu0 0.0
        %414 = vmatprep.subr.mxu0 0.0
        %415 = vmatpush2.xpose.msra.mxu0 0.0
        %416 = vmatprep.subr.mxu0 0.0
        %417 = vmatpush2.xpose.msra.mxu0 0.0
        %418 = vmatprep.subr.mxu0 0.0
        %419 = vmatpush2.xpose.msra.mxu0 0.0
        %420 = vmatprep.subr.mxu0 0.0
        %421 = vmatpush2.xpose.msra.mxu0 0.0
        %422 = vmatprep.subr.mxu0 0.0
        %423 = vmatpush2.xpose.msra.mxu0 0.0
        %424 = vmatprep.subr.mxu0 0.0
        %425 = vmatpush2.xpose.msra.mxu0 0.0
        %426 = vmatprep.subr.mxu0 0.0
        %427 = vmatpush2.xpose.msra.mxu0 0.0
        %428 = vmatprep.subr.mxu0 0.0
        %429 = vmatpush2.xpose.msra.mxu0 0.0
        %430 = vmatprep.mubr.f32.mxu0 0.0
        %431 = vmatmul.mubr.f32.gmra.mxu0 %v352
        %v432 = vpop.f32.mrf.mxu0
        %v433 = vadd.f32 %v348, %v432
        %v434 = vpop.f32.mrf.mxu0
        %435 = vdwg.mxu0
        %s436 = sld [smem:[#allocation2]]
        %v437 = vstv %s436
        %v438 = vmul.f32 %v433, %v437
        %439 = vst.msk [vmem:[%s243] sm:$0xff] %vm258, %v438
        %s440 = sand.u32 %s160, 1
        %s441 = scalar_lea.sflag [#allocation4], %s440
        %s442 = sand.u32 %s160, 1
        %s443 = smul.addr %s442, 8
        %s444 = scalar_lea.vmem [#allocation3], %s443
        // Predicated region
        $region45: #{tpu_custom_call.1} parent=43 // pred_check
          %p445 = pneg %p170
        $region46: #{tpu_custom_call.1} parent=43 // pred_check_branch
          %447 = sbr.rel (%p445) target = $region48
        $region47: #{tpu_custom_call.1} parent=43 // pred_region
          %s449 = ssub.s32 128, 128
          %450 = vsyncadd %s441, %s449
          %s451 = smul.addr %s21, 128
          %s452 = scalar_lea.hbm %s6, %s451
          %s454 = sshll.u32 %s444, 4
          %s455 = int_to_ptr.vmem [resolvable:$true] %s454
          %457 = dma.vmem_to_hbm [thread:$0]  %s455, 128, %s452, %s441
        $region48: #{tpu_custom_call.1} parent=43 // pred_fallthru
          _
      $region44: #{tpu_custom_call.1} parent=5 // pred_fallthru
        _
      %p458 = scmp.le.s32.totalorder 2, %s16
      // Predicated region
      $region49: #{tpu_custom_call.1} parent=5 // pred_check
        %p459 = pneg %p458
      $region50: #{tpu_custom_call.1} parent=5 // pred_check_branch
        %461 = sbr.rel (%p459) target = $region52
      $region51: #{tpu_custom_call.1} parent=5 // pred_region
        %s462 = ssub.s32 %s16, 2
        // Predicated region
        $region53: #{tpu_custom_call.1} parent=51 // pred_check
          %p463 = pneg %p176
        $region54: #{tpu_custom_call.1} parent=51 // pred_check_branch
          %465 = sbr.rel (%p463) target = $region56
        $region55: #{tpu_custom_call.1} parent=51 // pred_region
          %s466 = sand.u32 %s161, 1
          %s467 = scalar_lea.sflag [#allocation4], %s466
          %s468 = sand.u32 %s161, 1
          %s469 = smul.addr %s468, 8
          %s470 = scalar_lea.vmem [#allocation3], %s469
          %471 = dma.done %s467, 128
        $region56: #{tpu_custom_call.1} parent=51 // pred_fallthru
          _
      $region52: #{tpu_custom_call.1} parent=5 // pred_fallthru
        _
    $region6: #{tpu_custom_call.1} parent=1 // loop_footer
      %s20 = sadd.s32 1, %s16
    $region7: #{tpu_custom_call.1} parent=1 // loop_footer_branch
      %15 = sbr.rel target = $region3
    $region8: #{tpu_custom_call.1} parent=1 // loop_exit
      _
    %472 = vsyncpa [#allocation4], 1
    %s473 = scalar_lea.sflag [#allocation4], 1
    %474 = vsyncpa %s473, 1

</llo_original>
